<compile_context>
chip_gen: v6e
topology: v6e:2x2x1
jax: 0.10.0
libtpu: 0.0.40
codegen_flags: <defaults>
</compile_context>

<pallas_src>
import math

import jax
import jax.numpy as jnp
from jax.experimental import pallas as pl
from jax.experimental.pallas import tpu as pltpu


# -----------------------------------------------------------------------------
# PE table (built once, cached in the target dtype)
# -----------------------------------------------------------------------------
def init_positional_encoding(d_model: int, max_len: int = 5000,
                             dtype=jnp.float32) -> jnp.ndarray:
    """Sinusoidal PE table, shape [max_len, d_model], pre-cast to `dtype`."""
    assert d_model % 2 == 0, "PositionalEncoding requires an even d_model"
    position = jnp.arange(0, max_len, dtype=jnp.float32)[:, None]            # [max_len, 1]
    div_term = jnp.exp(
        -math.log(10000.0) * jnp.arange(0, d_model, 2, dtype=jnp.float32) / d_model
    )                                                                         # [d_model/2]
    angles = position * div_term                                              # [max_len, d_model/2]
    pe = jnp.zeros((max_len, d_model), dtype=jnp.float32)
    pe = pe.at[:, 0::2].set(jnp.sin(angles))
    pe = pe.at[:, 1::2].set(jnp.cos(angles))
    # TODO(synk): PyTorch keeps pe in fp32 and promotes the add; pre-casting to the
    # activation dtype is a (tiny) numerics change for bf16/fp16 inputs.
    return pe.astype(dtype)


# -----------------------------------------------------------------------------
# Kernel: plain broadcast add, nothing else on the store path
# -----------------------------------------------------------------------------
def _add_pe_kernel(x_ref, pe_ref, o_ref):
    # x_ref / o_ref: (B_TILE, R_TILE, LANE); pe_ref: (R_TILE, LANE) broadcast over batch.
    o_ref[...] = x_ref[...] + pe_ref[...][None, :, :]


# -----------------------------------------------------------------------------
# Tiling helpers
# -----------------------------------------------------------------------------
def _choose_tiles(batch: int, rows: int, lane: int, itemsize: int,
                  target_block_bytes: int):
    """Pick (b_tile, r_tile) blocks of ~target_block_bytes; r_tile multiple of 8
    or the full row dim. Grid uses cdiv, so no divisor requirement."""
    bytes_per_row = lane * itemsize
    total_bytes = batch * rows * bytes_per_row

    # Small-shape fast path: whole array in a single grid step.
    if total_bytes <= target_block_bytes:
        return batch, rows

    budget_rows = max(8, target_block_bytes // bytes_per_row)
    if rows <= budget_rows:
        r_tile = rows                                   # full dim (always legal)
    else:
        r_tile = max(8, (budget_rows // 8) * 8)         # multiple of 8, no divisor cliff

    b_tile = max(1, min(batch, target_block_bytes // max(1, r_tile * bytes_per_row)))
    return b_tile, r_tile


# -----------------------------------------------------------------------------
# Forward
# -----------------------------------------------------------------------------
def positional_encoding_forward(x: jnp.ndarray, pe_table: jnp.ndarray, *,
                                target_block_bytes: int = 4 * 1024 * 1024,
                                donate_x: bool = False) -> jnp.ndarray:
    """x: [batch, seq_len, d_model]; pe_table: [max_len, d_model] (any dtype)."""
    batch, seq_len, d_model = x.shape
    max_len = pe_table.shape[0]
    assert seq_len <= max_len, f"seq_len={seq_len} exceeds PE max_len={max_len}"
    itemsize = jnp.dtype(x.dtype).itemsize

    # No-op if the table was already cached in x.dtype at init.
    pe_slice = pe_table[:seq_len, :].astype(x.dtype)                  # [seq_len, d_model]

    # ---- Lane-dense view of the trailing (seq_len, d_model) dims ----
    pad = 0
    if d_model % 128 == 0:
        lane = d_model
    elif (seq_len * d_model) % 128 == 0:
        lane = 128
    else:
        # Pad the feature dim up to a multiple of 128 -> unmasked full-lane stores.
        d_pad_to = ((d_model + 127) // 128) * 128
        pad = d_pad_to - d_model
        x = jnp.pad(x, ((0, 0), (0, 0), (0, pad)))
        pe_slice = jnp.pad(pe_slice, ((0, 0), (0, pad)))
        lane = d_pad_to
    d_eff = d_model + pad
    rows = (seq_len * d_eff) // lane

    x3 = x.reshape(batch, rows, lane)
    pe2 = pe_slice.reshape(rows, lane)

    b_tile, r_tile = _choose_tiles(batch, rows, lane, itemsize, target_block_bytes)
    n_r = pl.cdiv(rows, r_tile)
    n_b = pl.cdiv(batch, b_tile)

    # VMEM limit derived from the actual double-buffered footprint (+ headroom),
    # capped so the same tiling stays safe on v7x's 64 MiB physical VMEM.
    blk_bytes = b_tile * r_tile * lane * itemsize
    pe_blk_bytes = r_tile * lane * itemsize
    vmem_limit = 2 * (2 * blk_bytes + pe_blk_bytes) + (2 << 20)
    vmem_limit = int(max(8 << 20, min(40 << 20, vmem_limit)))

    kwargs = {}
    if donate_x:
        # Alias x3 (input 0) to the output: halves HBM footprint for large activations
        # and avoids a defensive copy, when the caller can donate x.
        kwargs["input_output_aliases"] = {0: 0}

    out3 = pl.pallas_call(
        _add_pe_kernel,
        out_shape=jax.ShapeDtypeStruct((batch, rows, lane), x.dtype),
        grid_spec=pltpu.PrefetchScalarGridSpec(
            num_scalar_prefetch=0,
            # Batch innermost: the PE block index is constant across inner steps,
            # so the PE tile is not re-fetched per batch tile.
            grid=(n_r, n_b),
            in_specs=[
                pl.BlockSpec((b_tile, r_tile, lane), lambda r, b: (b, r, 0)),
                pl.BlockSpec((r_tile, lane), lambda r, b: (r, 0)),
            ],
            out_specs=pl.BlockSpec((b_tile, r_tile, lane), lambda r, b: (b, r, 0)),
        ),
        compiler_params=pltpu.CompilerParams(
            dimension_semantics=("parallel", "parallel"),
            vmem_limit_bytes=vmem_limit,
        ),
        **kwargs,
    )(x3, pe2)

    out = out3.reshape(batch, seq_len, d_eff)
    if pad:
        out = out[:, :, :d_model]
    return out


# -----------------------------------------------------------------------------
# Self-test
# -----------------------------------------------------------------------------
if __name__ == "__main__":
    key = jax.random.PRNGKey(0)

    # Test 1: small, d_model < 128 -> seq*d folds to lane=128.
    batch, seq_len, d_model, max_len = 2, 8, 32, 64
    x = jax.random.normal(key, (batch, seq_len, d_model), dtype=jnp.float32)
    pe_table = init_positional_encoding(d_model, max_len, dtype=x.dtype)
    out = jax.block_until_ready(positional_encoding_forward(x, pe_table))
    ref = x + pe_table[None, :seq_len, :]
    assert out.shape == x.shape
    assert jnp.allclose(out, ref, atol=1e-6, rtol=1e-6)

    # Test 2: d_model multiple of 128 -> natural lane-dense path.
    batch2, seq_len2, d_model2, max_len2 = 2, 16, 128, 64
    x2 = jax.random.normal(jax.random.PRNGKey(0), (batch2, seq_len2, d_model2),
                           dtype=jnp.float32)
    pe_table2 = init_positional_encoding(d_model2, max_len2, dtype=x2.dtype)
    out2 = jax.block_until_ready(positional_encoding_forward(x2, pe_table2))
    ref2 = x2 + pe_table2[None, :seq_len2, :]
    assert out2.shape == x2.shape
    assert jnp.allclose(out2, ref2, atol=1e-6, rtol=1e-6)

    # Test 3: non-foldable shape -> exercises the pad-to-128 lane path.
    batch3, seq_len3, d_model3, max_len3 = 2, 7, 48, 64
    x3 = jax.random.normal(jax.random.PRNGKey(0), (batch3, seq_len3, d_model3),
                           dtype=jnp.float32)
    pe_table3 = init_positional_encoding(d_model3, max_len3, dtype=x3.dtype)
    out3 = jax.block_until_ready(positional_encoding_forward(x3, pe_table3))
    ref3 = x3 + pe_table3[None, :seq_len3, :]
    assert out3.shape == x3.shape
    assert jnp.allclose(out3, ref3, atol=1e-6, rtol=1e-6)

    print("KERNEL_OK")
</pallas_src>

<mosaic_0001>
module attributes {stable_mosaic.version = 11 : i64} {
  func.func @_add_pe_kernel(%arg0: i32, %arg1: i32, %arg2: memref<2x2x128xf32, #tpu.memory_space<vmem>>, %arg3: memref<2x128xf32, #tpu.memory_space<vmem>>, %arg4: memref<2x2x128xf32, #tpu.memory_space<vmem>>) attributes {dimension_semantics = [#tpu.dimension_semantics<parallel>, #tpu.dimension_semantics<parallel>], iteration_bounds = array<i64: 1, 1>, scalar_prefetch = 0 : i64, scratch_operands = 0 : i64, tpu.core_type = #tpu.core_type<tc>, window_params = [{transform_indices = @transform_0, window_bounds = array<i64: 2, 2, 128>}, {transform_indices = @transform_1, window_bounds = array<i64: 2, 128>}, {transform_indices = @transform_2, window_bounds = array<i64: 2, 2, 128>}]} {
    %c0 = arith.constant 0 : index
    %c0_0 = arith.constant 0 : index
    %c0_1 = arith.constant 0 : index
    %0 = vector.load %arg2[%c0, %c0_0, %c0_1] : memref<2x2x128xf32, #tpu.memory_space<vmem>>, vector<2x2x128xf32>
    %c0_2 = arith.constant 0 : index
    %c0_3 = arith.constant 0 : index
    %1 = vector.load %arg3[%c0_2, %c0_3] : memref<2x128xf32, #tpu.memory_space<vmem>>, vector<2x128xf32>
    %2 = vector.shape_cast %1 : vector<2x128xf32> to vector<1x2x128xf32>
    %3 = vector.broadcast %2 : vector<1x2x128xf32> to vector<2x2x128xf32>
    %4 = arith.addf %0, %3 : vector<2x2x128xf32>
    %c0_4 = arith.constant 0 : index
    %c0_5 = arith.constant 0 : index
    %c0_6 = arith.constant 0 : index
    %5 = vector.load %arg4[%c0_4, %c0_5, %c0_6] : memref<2x2x128xf32, #tpu.memory_space<vmem>>, vector<2x2x128xf32>
    tpu.vector_store %arg4[%c0_4, %c0_5, %c0_6], %4 {strides = array<i32>} : memref<2x2x128xf32, #tpu.memory_space<vmem>>, vector<2x2x128xf32>,
    return
  }
  func.func @transform_0(%arg0: i32, %arg1: i32) -> (i32, i32, i32) {
    %c0_i32 = arith.constant 0 : i32
    %c0_i32_0 = arith.constant 0 : i32
    return %arg1, %arg0, %c0_i32 : i32, i32, i32
  }
  func.func @transform_1(%arg0: i32, %arg1: i32) -> (i32, i32) {
    %c0_i32 = arith.constant 0 : i32
    %c0_i32_0 = arith.constant 0 : i32
    return %arg0, %c0_i32 : i32, i32
  }
  func.func @transform_2(%arg0: i32, %arg1: i32) -> (i32, i32, i32) {
    %c0_i32 = arith.constant 0 : i32
    %c0_i32_0 = arith.constant 0 : i32
    return %arg1, %arg0, %c0_i32 : i32, i32, i32
  }
}

</mosaic_0001>

<llo_original>
// kernel: tpu_custom_call.1
$region0: #{tpu_custom_call.1}
  #allocation0 [shape = 'u32[]', space=smem, size = 0x4, offset = 0x4, fixed_abs, tag = 'smem constant byte address 0x4 - core index']
  #allocation1 [shape = 'u32[144,128]{1,0:T(1,128)}', space=vmem, size = 0x12000, scoped, tag = 'internal scratch']
  %s0 = inlined_call_operand.hbm [shape: f32[2,2,128], index: 0, kind: input, shape index: {}]
  %s1 = inlined_call_operand.hbm [shape: f32[2,128], index: 1, kind: input, shape index: {}]
  %s2 = inlined_call_operand.hbm [shape: f32[2,2,128], index: 2, kind: output, shape index: {}]
  %s3 = sld [smem:[#allocation0]]
  $region26: #{tpu_custom_call.1} parent=0
    _
  %s5 = ssub.s32 1, %s3
  %s6 = scalar_select 0, %s5, %s3
  $region1: #{tpu_custom_call.1} parent=0
    #allocation2 [shape = 'u8[2048]{0}', space=vmem, size = 0x800, scoped, tag = 'input window, operand 0, single buffered']
    #allocation3 [shape = 's32[1]{0}', space=sflag, size = 0x4, scoped, tag = 'scoped memory for tpu_custom_call.1']
    #allocation4 [shape = 's32[1]{0}', space=sflag, size = 0x4, scoped, tag = 'scoped memory for tpu_custom_call.1']
    #allocation5 [shape = 'u8[1024]{0}', space=vmem, size = 0x400, scoped, tag = 'input window, operand 1, single buffered']
    #allocation6 [shape = 's32[1]{0}', space=sflag, size = 0x4, scoped, tag = 'scoped memory for tpu_custom_call.1']
    #allocation7 [shape = 'u8[2048]{0}', space=vmem, size = 0x800, scoped, tag = 'output window, operand 0, single buffered']
    %7 = vsyncpa [#allocation3], 0
    %8 = vsyncpa [#allocation6], 0
    %9 = vsyncpa [#allocation4], 0
    // Predicated region
    $region2: #{tpu_custom_call.1} parent=1 // pred_check
      _
    $region3: #{tpu_custom_call.1} parent=1 // pred_check_branch
      %11 = sbr.rel (0) target = $region5
    $region4: #{tpu_custom_call.1} parent=1 // pred_region
      %s13 = ssub.s32 64, 64
      %14 = vsyncadd [#allocation3], %s13
      %s15 = sshll.u32 [#allocation2], 4
      %s16 = int_to_ptr.vmem [resolvable:$true] %s15
      %21 = dma.hbm_to_vmem [thread:$0]  %s0, 64, %s16, [#allocation3], 32, 32, 2
    $region5: #{tpu_custom_call.1} parent=1 // pred_fallthru
      _
    // Predicated region
    $region6: #{tpu_custom_call.1} parent=1 // pred_check
      _
    $region7: #{tpu_custom_call.1} parent=1 // pred_check_branch
      %23 = sbr.rel (0) target = $region9
    $region8: #{tpu_custom_call.1} parent=1 // pred_region
      %s25 = ssub.s32 32, 32
      %26 = vsyncadd [#allocation6], %s25
      %s28 = sshll.u32 [#allocation5], 4
      %s29 = int_to_ptr.vmem [resolvable:$true] %s28
      %31 = dma.hbm_to_vmem [thread:$0]  %s1, 32, %s29, [#allocation6]
    $region9: #{tpu_custom_call.1} parent=1 // pred_fallthru
      _
    // Predicated region
    $region10: #{tpu_custom_call.1} parent=1 // pred_check
      _
    $region11: #{tpu_custom_call.1} parent=1 // pred_check_branch
      %33 = sbr.rel (0) target = $region13
    $region12: #{tpu_custom_call.1} parent=1 // pred_region
      %34 = dma.done [#allocation3], 64
    $region13: #{tpu_custom_call.1} parent=1 // pred_fallthru
      _
    // Predicated region
    $region14: #{tpu_custom_call.1} parent=1 // pred_check
      _
    $region15: #{tpu_custom_call.1} parent=1 // pred_check_branch
      %36 = sbr.rel (0) target = $region17
    $region16: #{tpu_custom_call.1} parent=1 // pred_region
      %37 = dma.done [#allocation6], 32
    $region17: #{tpu_custom_call.1} parent=1 // pred_fallthru
      _
    %v38 = vld [vmem:[#allocation2] sm:$0x3]
    %v39 = vld [vmem:[#allocation2 + $0x2] sm:$0x3]
    %v40 = vld [vmem:[#allocation5] sm:$0x3]
    %v41 = vadd.f32 %v38, %v40
    %v42 = vadd.f32 %v39, %v40
    %43 = vst [vmem:[#allocation7] sm:$0x3] %v41
    %44 = vst [vmem:[#allocation7 + $0x2] sm:$0x3] %v42
    // Predicated region
    $region18: #{tpu_custom_call.1} parent=1 // pred_check
      _
    $region19: #{tpu_custom_call.1} parent=1 // pred_check_branch
      %46 = sbr.rel (0) target = $region21
    $region20: #{tpu_custom_call.1} parent=1 // pred_region
      %s48 = ssub.s32 64, 64
      %49 = vsyncadd [#allocation4], %s48
      %s50 = sshll.u32 [#allocation7], 4
      %s51 = int_to_ptr.vmem [resolvable:$true] %s50
      %56 = dma.vmem_to_hbm [thread:$0]  %s51, 64, %s2, [#allocation4], 32, 32, 2
    $region21: #{tpu_custom_call.1} parent=1 // pred_fallthru
      _
    // Predicated region
    $region22: #{tpu_custom_call.1} parent=1 // pred_check
      _
    $region23: #{tpu_custom_call.1} parent=1 // pred_check_branch
      %58 = sbr.rel (0) target = $region25
    $region24: #{tpu_custom_call.1} parent=1 // pred_region
      %59 = dma.done [#allocation4], 64
    $region25: #{tpu_custom_call.1} parent=1 // pred_fallthru
      _
    %60 = vsyncpa [#allocation3], 1
    %61 = vsyncpa [#allocation6], 1
    %62 = vsyncpa [#allocation4], 1

</llo_original>
